<compile_context>
chip_gen: v5e
topology: v5e:2x2
jax: 0.10.0
libtpu: 0.0.40
codegen_flags: <defaults>
</compile_context>

<pallas_src>
import functools

import jax
import jax.numpy as jnp
from jax import lax
from jax.experimental import pallas as pl
from jax.experimental.pallas import tpu as pltpu

EMBED_DIM = 200
NUM_HEADS = 8
HEAD_DIM = EMBED_DIM // NUM_HEADS          # 25
HEAD_PAD = 32                              # sublane-aligned per-head stripe
EMBED_PAD = 256                            # lane-aligned embed (2 x 128)
QK_WIDTH = 2 * NUM_HEADS * HEAD_PAD        # 512 fused Q|K output lanes


def _mha_weights_kernel(x_ref, w_ref, b_ref, out_ref, *,
                        n_valid, b_tile, seq_valid, l_pad, num_heads, head_pad):
    """One batch tile -> partial sum over that tile of head-averaged softmax weights."""
    e_pad = x_ref.shape[-1]
    # Free sublane-aligned merge of leading dims (l_pad is a multiple of 8).
    x2d = x_ref[...].reshape(b_tile * l_pad, e_pad)

    # Fused Q|K projection: (B*L, 256) @ (256, 512).  The 1/sqrt(head_dim)
    # scale is already folded into the Q half of the weights/bias.
    qk = jnp.dot(x2d, w_ref[...], preferred_element_type=jnp.float32) + b_ref[...]
    hp_total = num_heads * head_pad
    q = qk[:, :hp_total]                       # 128-lane aligned split
    k = qk[:, hp_total:]

    # Additive key mask for seq padding (static no-op when l_pad == seq_valid).
    key_bias = None
    if l_pad > seq_valid:
        kidx = lax.broadcasted_iota(jnp.int32, (1, 1, l_pad), 2)
        key_bias = jnp.where(kidx < seq_valid, 0.0, -1e30).astype(jnp.float32)

    acc = jnp.zeros((b_tile, l_pad, l_pad), jnp.float32)
    # TODO(synk): for large seq_len, switch this static unroll to a
    # lax.fori_loop / heads-as-grid-axis so per-head (B,L,L) temporaries do
    # not all stay live at once (neutral at L=8).
    for h in range(num_heads):                 # static 32-lane slices
        qh = q[:, h * head_pad:(h + 1) * head_pad].reshape(b_tile, l_pad, head_pad)
        kh = k[:, h * head_pad:(h + 1) * head_pad].reshape(b_tile, l_pad, head_pad)
        # Batched (L, HP) @ (HP, L) contraction on last dims (no transpose).
        s = lax.dot_general(qh, kh, (((2,), (2,)), ((0,), (0,))),
                            preferred_element_type=jnp.float32)  # (B, L, L)
        if key_bias is not None:
            s = s + key_bias
        s = s - jnp.max(s, axis=-1, keepdims=True)
        e = jnp.exp(s)
        denom = jnp.sum(e, axis=-1, keepdims=True)
        r = pl.reciprocal(denom, approx=True)   # EUP vrcp
        r = r * (2.0 - denom * r)               # one Newton step -> f32 accuracy
        acc = acc + e * r

    # Mask batch-padding rows, sum this tile, average over heads.
    base = pl.program_id(0) * b_tile
    bidx = lax.broadcasted_iota(jnp.int32, (b_tile, 1, 1), 0) + base
    mask = (bidx < n_valid).astype(jnp.float32)
    out_ref[...] = jnp.sum(acc * mask, axis=0) * (1.0 / num_heads)


def _prep_padded_weights(in_proj_weight, in_proj_bias):
    """Fused, head-padded, lane-aligned Q|K projection weights: (256, 512) / (1, 512)."""
    e, h, hd, hp, ep = EMBED_DIM, NUM_HEADS, HEAD_DIM, HEAD_PAD, EMBED_PAD
    scale = 1.0 / (float(hd) ** 0.5)

    wq = in_proj_weight[:e] * scale            # (E, E) torch layout (out, in)
    wk = in_proj_weight[e:2 * e]
    bq = in_proj_bias[:e] * scale
    bk = in_proj_bias[e:2 * e]

    def pad_w(w):                              # -> (E_pad, H*HEAD_PAD) == padded W^T
        w = w.reshape(h, hd, e)
        w = jnp.pad(w, ((0, 0), (0, hp - hd), (0, ep - e)))
        return w.reshape(h * hp, ep).T

    def pad_b(b):                              # -> (1, H*HEAD_PAD)
        b = b.reshape(h, hd)
        b = jnp.pad(b, ((0, 0), (0, hp - hd)))
        return b.reshape(1, h * hp)

    w_fused = jnp.concatenate([pad_w(wq), pad_w(wk)], axis=1)      # (256, 512)
    b_fused = jnp.concatenate([pad_b(bq), pad_b(bk)], axis=1)      # (1, 512)
    return w_fused, b_fused


def _choose_tiling(n, l_pad):
    """Target ~256 projection rows per tile, but keep >=2 tiles when n >= 2
    so both v7x TensorCores get an independent 'parallel' tile."""
    b_tile = min(n, max(1, 256 // l_pad))
    if n >= 2 and pl.cdiv(n, b_tile) < 2:
        b_tile = (n + 1) // 2
    num_tiles = pl.cdiv(n, b_tile)
    return b_tile, num_tiles


def complex_ann_forward(x, in_proj_weight, in_proj_bias):
    """x: (N, L, E=200) float32. Returns (L, L) head/batch-averaged attention weights."""
    n, seq_len, e = x.shape
    assert e == EMBED_DIM

    l_pad = ((seq_len + 7) // 8) * 8           # sublane-aligned sequence length
    w_fused, b_fused = _prep_padded_weights(in_proj_weight, in_proj_bias)

    b_tile, num_tiles = _choose_tiling(n, l_pad)
    n_pad = num_tiles * b_tile
    x_pad = jnp.pad(x, ((0, n_pad - n), (0, l_pad - seq_len), (0, EMBED_PAD - e)))

    kernel = functools.partial(
        _mha_weights_kernel,
        n_valid=n, b_tile=b_tile, seq_valid=seq_len, l_pad=l_pad,
        num_heads=NUM_HEADS, head_pad=HEAD_PAD)

    partials = pl.pallas_call(
        kernel,
        out_shape=jax.ShapeDtypeStruct((num_tiles, l_pad, l_pad), jnp.float32),
        grid_spec=pltpu.PrefetchScalarGridSpec(
            num_scalar_prefetch=0,
            grid=(num_tiles,),
            in_specs=[
                pl.BlockSpec((b_tile, l_pad, EMBED_PAD), lambda t: (t, 0, 0)),
                pl.BlockSpec((EMBED_PAD, QK_WIDTH), lambda t: (0, 0)),
                pl.BlockSpec((1, QK_WIDTH), lambda t: (0, 0)),
            ],
            out_specs=pl.BlockSpec((None, l_pad, l_pad), lambda t: (t, 0, 0)),
        ),
        compiler_params=pltpu.CompilerParams(
            dimension_semantics=("parallel",),        # independent per-tile partials
            vmem_limit_bytes=32 * 1024 * 1024),       # same scoped budget on v5e/v6e/v7x
    )(x_pad, w_fused, b_fused)

    # Tiny final reduction (num_tiles x L_pad x L_pad) + crop in the wrapper.
    out = jnp.sum(partials, axis=0) * (1.0 / n)
    return out[:seq_len, :seq_len]


def _reference_forward(x, in_proj_weight, in_proj_bias,
                       embed_dim=EMBED_DIM, num_heads=NUM_HEADS):
    """Pure-JAX reference mirroring torch.nn.MultiheadAttention weight path."""
    n, seq_len, e = x.shape
    head_dim = embed_dim // num_heads
    wq = in_proj_weight[:embed_dim]
    wk = in_proj_weight[embed_dim:2 * embed_dim]
    bq = in_proj_bias[:embed_dim]
    bk = in_proj_bias[embed_dim:2 * embed_dim]
    q = x @ wq.T + bq
    k = x @ wk.T + bk
    q = q.reshape(n, seq_len, num_heads, head_dim).transpose(0, 2, 1, 3)
    k = k.reshape(n, seq_len, num_heads, head_dim).transpose(0, 2, 1, 3)
    scores = jnp.einsum('nhld,nhmd->nhlm', q, k) / jnp.sqrt(float(head_dim))
    w = jax.nn.softmax(scores, axis=-1)
    w = w.mean(axis=1)      # average over heads (average_attn_weights=True)
    return w.mean(axis=0)   # .mean(dim=0) over batch


if __name__ == "__main__":
    key = jax.random.PRNGKey(0)
    k_x, k_w, k_b = jax.random.split(key, 3)

    batch, seq = 2, 8
    x = jax.random.normal(k_x, (batch, seq, EMBED_DIM), dtype=jnp.float32)

    # Deterministic synthetic parameters matching nn.MultiheadAttention shapes:
    #   in_proj_weight: (3E, E), in_proj_bias: (3E,)
    bound = 1.0 / (EMBED_DIM ** 0.5)
    in_proj_weight = jax.random.uniform(
        k_w, (3 * EMBED_DIM, EMBED_DIM), jnp.float32, -bound, bound)
    in_proj_bias = jax.random.uniform(
        k_b, (3 * EMBED_DIM,), jnp.float32, -bound, bound)
    # TODO(synk): the V projection and out_proj do not affect the returned
    # attention-weight similarity matrix, so they are intentionally omitted.

    out = complex_ann_forward(x, in_proj_weight, in_proj_bias)
    out = jax.block_until_ready(out)

    ref = _reference_forward(x, in_proj_weight, in_proj_bias)
    assert out.shape == (seq, seq)
    assert jnp.allclose(out, ref, atol=1e-5, rtol=1e-5), (
        f"max err {jnp.max(jnp.abs(out - ref))}")

    print("KERNEL_OK")
</pallas_src>

<mosaic_0001>
module attributes {stable_mosaic.version = 11 : i64} {
  func.func @_mha_weights_kernel(%arg0: i32, %arg1: memref<1x8x256xf32, #tpu.memory_space<vmem>>, %arg2: memref<256x512xf32, #tpu.memory_space<vmem>>, %arg3: memref<1x512xf32, #tpu.memory_space<vmem>>, %arg4: memref<1x8x8xf32, #tpu.memory_space<vmem>>) attributes {dimension_semantics = [#tpu.dimension_semantics<parallel>], iteration_bounds = array<i64: 2>, scalar_prefetch = 0 : i64, scratch_operands = 0 : i64, tpu.core_type = #tpu.core_type<tc>, window_params = [{transform_indices = @transform_0, window_bounds = array<i64: 1, 8, 256>}, {pipeline_mode = #tpu.pipeline_mode<synchronous>, transform_indices = @transform_1, window_bounds = array<i64: 256, 512>}, {pipeline_mode = #tpu.pipeline_mode<synchronous>, transform_indices = @transform_2, window_bounds = array<i64: 1, 512>}, {transform_indices = @transform_3, window_bounds = array<i64: 1, 8, 8>}]} {
    %c0 = arith.constant 0 : index
    %c0_0 = arith.constant 0 : index
    %c0_1 = arith.constant 0 : index
    %0 = vector.load %arg1[%c0, %c0_0, %c0_1] : memref<1x8x256xf32, #tpu.memory_space<vmem>>, vector<1x8x256xf32>
    %1 = vector.shape_cast %0 : vector<1x8x256xf32> to vector<8x256xf32>
    %c0_2 = arith.constant 0 : index
    %c0_3 = arith.constant 0 : index
    %2 = vector.load %arg2[%c0_2, %c0_3] : memref<256x512xf32, #tpu.memory_space<vmem>>, vector<256x512xf32>
    %cst = arith.constant dense<0.000000e+00> : vector<8x512xf32>
    %3 = tpu.matmul %1, %2, %cst {dimension_numbers = #tpu.dot_dimension_numbers<[1], [0], [0], [1], [0, 0, 1, 1], [], []>} : vector<8x256xf32>, vector<256x512xf32>, vector<8x512xf32> -> vector<8x512xf32>
    %c0_4 = arith.constant 0 : index
    %c0_5 = arith.constant 0 : index
    %4 = vector.load %arg3[%c0_4, %c0_5] : memref<1x512xf32, #tpu.memory_space<vmem>>, vector<1x512xf32>
    %5 = vector.broadcast %4 : vector<1x512xf32> to vector<8x512xf32>
    %6 = arith.addf %3, %5 : vector<8x512xf32>
    %7 = vector.extract_strided_slice %6 {offsets = [0, 0], sizes = [8, 256], strides = [1, 1]} : vector<8x512xf32> to vector<8x256xf32>
    %8 = vector.extract_strided_slice %6 {offsets = [0, 256], sizes = [8, 256], strides = [1, 1]} : vector<8x512xf32> to vector<8x256xf32>
    %cst_6 = arith.constant 0.000000e+00 : f32
    %9 = vector.broadcast %cst_6 : f32 to vector<1x8x8xf32>
    %10 = vector.extract_strided_slice %7 {offsets = [0, 0], sizes = [8, 32], strides = [1, 1]} : vector<8x256xf32> to vector<8x32xf32>
    %11 = vector.shape_cast %10 : vector<8x32xf32> to vector<1x8x32xf32>
    %12 = vector.extract_strided_slice %8 {offsets = [0, 0], sizes = [8, 32], strides = [1, 1]} : vector<8x256xf32> to vector<8x32xf32>
    %13 = vector.shape_cast %12 : vector<8x32xf32> to vector<1x8x32xf32>
    %cst_7 = arith.constant dense<0.000000e+00> : vector<1x8x8xf32>
    %14 = tpu.matmul %11, %13, %cst_7 {dimension_numbers = #tpu.dot_dimension_numbers<[2], [2], [1], [1], [0, 0, 0, 1, 1, 1], [0], [0]>} : vector<1x8x32xf32>, vector<1x8x32xf32>, vector<1x8x8xf32> -> vector<1x8x8xf32>
    %cst_8 = arith.constant dense<0xFF800000> : vector<1x8xf32>
    %15 = vector.multi_reduction <maximumf>, %14, %cst_8 [2] : vector<1x8x8xf32> to vector<1x8xf32>
    %16 = vector.shape_cast %15 : vector<1x8xf32> to vector<1x8x1xf32>
    %17 = vector.broadcast %16 : vector<1x8x1xf32> to vector<1x8x8xf32>
    %18 = arith.subf %14, %17 : vector<1x8x8xf32>
    %19 = math.exp %18 : vector<1x8x8xf32>
    %cst_9 = arith.constant dense<0.000000e+00> : vector<1x8xf32>
    %20 = vector.multi_reduction <add>, %19, %cst_9 [2] : vector<1x8x8xf32> to vector<1x8xf32>
    %21 = vector.shape_cast %20 : vector<1x8xf32> to vector<1x8x1xf32>
    %22 = tpu.reciprocal %21 {approx = true} : vector<1x8x1xf32> -> vector<1x8x1xf32>
    %23 = arith.mulf %21, %22 : vector<1x8x1xf32>
    %cst_10 = arith.constant 2.000000e+00 : f32
    %24 = vector.broadcast %cst_10 : f32 to vector<1x8x1xf32>
    %25 = arith.subf %24, %23 : vector<1x8x1xf32>
    %26 = arith.mulf %22, %25 : vector<1x8x1xf32>
    %27 = vector.broadcast %26 : vector<1x8x1xf32> to vector<1x8x8xf32>
    %28 = arith.mulf %19, %27 : vector<1x8x8xf32>
    %29 = arith.addf %9, %28 : vector<1x8x8xf32>
    %30 = vector.extract_strided_slice %7 {offsets = [0, 32], sizes = [8, 32], strides = [1, 1]} : vector<8x256xf32> to vector<8x32xf32>
    %31 = vector.shape_cast %30 : vector<8x32xf32> to vector<1x8x32xf32>
    %32 = vector.extract_strided_slice %8 {offsets = [0, 32], sizes = [8, 32], strides = [1, 1]} : vector<8x256xf32> to vector<8x32xf32>
    %33 = vector.shape_cast %32 : vector<8x32xf32> to vector<1x8x32xf32>
    %cst_11 = arith.constant dense<0.000000e+00> : vector<1x8x8xf32>
    %34 = tpu.matmul %31, %33, %cst_11 {dimension_numbers = #tpu.dot_dimension_numbers<[2], [2], [1], [1], [0, 0, 0, 1, 1, 1], [0], [0]>} : vector<1x8x32xf32>, vector<1x8x32xf32>, vector<1x8x8xf32> -> vector<1x8x8xf32>
    %cst_12 = arith.constant dense<0xFF800000> : vector<1x8xf32>
    %35 = vector.multi_reduction <maximumf>, %34, %cst_12 [2] : vector<1x8x8xf32> to vector<1x8xf32>
    %36 = vector.shape_cast %35 : vector<1x8xf32> to vector<1x8x1xf32>
    %37 = vector.broadcast %36 : vector<1x8x1xf32> to vector<1x8x8xf32>
    %38 = arith.subf %34, %37 : vector<1x8x8xf32>
    %39 = math.exp %38 : vector<1x8x8xf32>
    %cst_13 = arith.constant dense<0.000000e+00> : vector<1x8xf32>
    %40 = vector.multi_reduction <add>, %39, %cst_13 [2] : vector<1x8x8xf32> to vector<1x8xf32>
    %41 = vector.shape_cast %40 : vector<1x8xf32> to vector<1x8x1xf32>
    %42 = tpu.reciprocal %41 {approx = true} : vector<1x8x1xf32> -> vector<1x8x1xf32>
    %43 = arith.mulf %41, %42 : vector<1x8x1xf32>
    %cst_14 = arith.constant 2.000000e+00 : f32
    %44 = vector.broadcast %cst_14 : f32 to vector<1x8x1xf32>
    %45 = arith.subf %44, %43 : vector<1x8x1xf32>
    %46 = arith.mulf %42, %45 : vector<1x8x1xf32>
    %47 = vector.broadcast %46 : vector<1x8x1xf32> to vector<1x8x8xf32>
    %48 = arith.mulf %39, %47 : vector<1x8x8xf32>
    %49 = arith.addf %29, %48 : vector<1x8x8xf32>
    %50 = vector.extract_strided_slice %7 {offsets = [0, 64], sizes = [8, 32], strides = [1, 1]} : vector<8x256xf32> to vector<8x32xf32>
    %51 = vector.shape_cast %50 : vector<8x32xf32> to vector<1x8x32xf32>
    %52 = vector.extract_strided_slice %8 {offsets = [0, 64], sizes = [8, 32], strides = [1, 1]} : vector<8x256xf32> to vector<8x32xf32>
    %53 = vector.shape_cast %52 : vector<8x32xf32> to vector<1x8x32xf32>
    %cst_15 = arith.constant dense<0.000000e+00> : vector<1x8x8xf32>
    %54 = tpu.matmul %51, %53, %cst_15 {dimension_numbers = #tpu.dot_dimension_numbers<[2], [2], [1], [1], [0, 0, 0, 1, 1, 1], [0], [0]>} : vector<1x8x32xf32>, vector<1x8x32xf32>, vector<1x8x8xf32> -> vector<1x8x8xf32>
    %cst_16 = arith.constant dense<0xFF800000> : vector<1x8xf32>
    %55 = vector.multi_reduction <maximumf>, %54, %cst_16 [2] : vector<1x8x8xf32> to vector<1x8xf32>
    %56 = vector.shape_cast %55 : vector<1x8xf32> to vector<1x8x1xf32>
    %57 = vector.broadcast %56 : vector<1x8x1xf32> to vector<1x8x8xf32>
    %58 = arith.subf %54, %57 : vector<1x8x8xf32>
    %59 = math.exp %58 : vector<1x8x8xf32>
    %cst_17 = arith.constant dense<0.000000e+00> : vector<1x8xf32>
    %60 = vector.multi_reduction <add>, %59, %cst_17 [2] : vector<1x8x8xf32> to vector<1x8xf32>
    %61 = vector.shape_cast %60 : vector<1x8xf32> to vector<1x8x1xf32>
    %62 = tpu.reciprocal %61 {approx = true} : vector<1x8x1xf32> -> vector<1x8x1xf32>
    %63 = arith.mulf %61, %62 : vector<1x8x1xf32>
    %cst_18 = arith.constant 2.000000e+00 : f32
    %64 = vector.broadcast %cst_18 : f32 to vector<1x8x1xf32>
    %65 = arith.subf %64, %63 : vector<1x8x1xf32>
    %66 = arith.mulf %62, %65 : vector<1x8x1xf32>
    %67 = vector.broadcast %66 : vector<1x8x1xf32> to vector<1x8x8xf32>
    %68 = arith.mulf %59, %67 : vector<1x8x8xf32>
    %69 = arith.addf %49, %68 : vector<1x8x8xf32>
    %70 = vector.extract_strided_slice %7 {offsets = [0, 96], sizes = [8, 32], strides = [1, 1]} : vector<8x256xf32> to vector<8x32xf32>
    %71 = vector.shape_cast %70 : vector<8x32xf32> to vector<1x8x32xf32>
    %72 = vector.extract_strided_slice %8 {offsets = [0, 96], sizes = [8, 32], strides = [1, 1]} : vector<8x256xf32> to vector<8x32xf32>
    %73 = vector.shape_cast %72 : vector<8x32xf32> to vector<1x8x32xf32>
    %cst_19 = arith.constant dense<0.000000e+00> : vector<1x8x8xf32>
    %74 = tpu.matmul %71, %73, %cst_19 {dimension_numbers = #tpu.dot_dimension_numbers<[2], [2], [1], [1], [0, 0, 0, 1, 1, 1], [0], [0]>} : vector<1x8x32xf32>, vector<1x8x32xf32>, vector<1x8x8xf32> -> vector<1x8x8xf32>
    %cst_20 = arith.constant dense<0xFF800000> : vector<1x8xf32>
    %75 = vector.multi_reduction <maximumf>, %74, %cst_20 [2] : vector<1x8x8xf32> to vector<1x8xf32>
    %76 = vector.shape_cast %75 : vector<1x8xf32> to vector<1x8x1xf32>
    %77 = vector.broadcast %76 : vector<1x8x1xf32> to vector<1x8x8xf32>
    %78 = arith.subf %74, %77 : vector<1x8x8xf32>
    %79 = math.exp %78 : vector<1x8x8xf32>
    %cst_21 = arith.constant dense<0.000000e+00> : vector<1x8xf32>
    %80 = vector.multi_reduction <add>, %79, %cst_21 [2] : vector<1x8x8xf32> to vector<1x8xf32>
    %81 = vector.shape_cast %80 : vector<1x8xf32> to vector<1x8x1xf32>
    %82 = tpu.reciprocal %81 {approx = true} : vector<1x8x1xf32> -> vector<1x8x1xf32>
    %83 = arith.mulf %81, %82 : vector<1x8x1xf32>
    %cst_22 = arith.constant 2.000000e+00 : f32
    %84 = vector.broadcast %cst_22 : f32 to vector<1x8x1xf32>
    %85 = arith.subf %84, %83 : vector<1x8x1xf32>
    %86 = arith.mulf %82, %85 : vector<1x8x1xf32>
    %87 = vector.broadcast %86 : vector<1x8x1xf32> to vector<1x8x8xf32>
    %88 = arith.mulf %79, %87 : vector<1x8x8xf32>
    %89 = arith.addf %69, %88 : vector<1x8x8xf32>
    %90 = vector.extract_strided_slice %7 {offsets = [0, 128], sizes = [8, 32], strides = [1, 1]} : vector<8x256xf32> to vector<8x32xf32>
    %91 = vector.shape_cast %90 : vector<8x32xf32> to vector<1x8x32xf32>
    %92 = vector.extract_strided_slice %8 {offsets = [0, 128], sizes = [8, 32], strides = [1, 1]} : vector<8x256xf32> to vector<8x32xf32>
    %93 = vector.shape_cast %92 : vector<8x32xf32> to vector<1x8x32xf32>
    %cst_23 = arith.constant dense<0.000000e+00> : vector<1x8x8xf32>
    %94 = tpu.matmul %91, %93, %cst_23 {dimension_numbers = #tpu.dot_dimension_numbers<[2], [2], [1], [1], [0, 0, 0, 1, 1, 1], [0], [0]>} : vector<1x8x32xf32>, vector<1x8x32xf32>, vector<1x8x8xf32> -> vector<1x8x8xf32>
    %cst_24 = arith.constant dense<0xFF800000> : vector<1x8xf32>
    %95 = vector.multi_reduction <maximumf>, %94, %cst_24 [2] : vector<1x8x8xf32> to vector<1x8xf32>
    %96 = vector.shape_cast %95 : vector<1x8xf32> to vector<1x8x1xf32>
    %97 = vector.broadcast %96 : vector<1x8x1xf32> to vector<1x8x8xf32>
    %98 = arith.subf %94, %97 : vector<1x8x8xf32>
    %99 = math.exp %98 : vector<1x8x8xf32>
    %cst_25 = arith.constant dense<0.000000e+00> : vector<1x8xf32>
    %100 = vector.multi_reduction <add>, %99, %cst_25 [2] : vector<1x8x8xf32> to vector<1x8xf32>
    %101 = vector.shape_cast %100 : vector<1x8xf32> to vector<1x8x1xf32>
    %102 = tpu.reciprocal %101 {approx = true} : vector<1x8x1xf32> -> vector<1x8x1xf32>
    %103 = arith.mulf %101, %102 : vector<1x8x1xf32>
    %cst_26 = arith.constant 2.000000e+00 : f32
    %104 = vector.broadcast %cst_26 : f32 to vector<1x8x1xf32>
    %105 = arith.subf %104, %103 : vector<1x8x1xf32>
    %106 = arith.mulf %102, %105 : vector<1x8x1xf32>
    %107 = vector.broadcast %106 : vector<1x8x1xf32> to vector<1x8x8xf32>
    %108 = arith.mulf %99, %107 : vector<1x8x8xf32>
    %109 = arith.addf %89, %108 : vector<1x8x8xf32>
    %110 = vector.extract_strided_slice %7 {offsets = [0, 160], sizes = [8, 32], strides = [1, 1]} : vector<8x256xf32> to vector<8x32xf32>
    %111 = vector.shape_cast %110 : vector<8x32xf32> to vector<1x8x32xf32>
    %112 = vector.extract_strided_slice %8 {offsets = [0, 160], sizes = [8, 32], strides = [1, 1]} : vector<8x256xf32> to vector<8x32xf32>
    %113 = vector.shape_cast %112 : vector<8x32xf32> to vector<1x8x32xf32>
    %cst_27 = arith.constant dense<0.000000e+00> : vector<1x8x8xf32>
    %114 = tpu.matmul %111, %113, %cst_27 {dimension_numbers = #tpu.dot_dimension_numbers<[2], [2], [1], [1], [0, 0, 0, 1, 1, 1], [0], [0]>} : vector<1x8x32xf32>, vector<1x8x32xf32>, vector<1x8x8xf32> -> vector<1x8x8xf32>
    %cst_28 = arith.constant dense<0xFF800000> : vector<1x8xf32>
    %115 = vector.multi_reduction <maximumf>, %114, %cst_28 [2] : vector<1x8x8xf32> to vector<1x8xf32>
    %116 = vector.shape_cast %115 : vector<1x8xf32> to vector<1x8x1xf32>
    %117 = vector.broadcast %116 : vector<1x8x1xf32> to vector<1x8x8xf32>
    %118 = arith.subf %114, %117 : vector<1x8x8xf32>
    %119 = math.exp %118 : vector<1x8x8xf32>
    %cst_29 = arith.constant dense<0.000000e+00> : vector<1x8xf32>
    %120 = vector.multi_reduction <add>, %119, %cst_29 [2] : vector<1x8x8xf32> to vector<1x8xf32>
    %121 = vector.shape_cast %120 : vector<1x8xf32> to vector<1x8x1xf32>
    %122 = tpu.reciprocal %121 {approx = true} : vector<1x8x1xf32> -> vector<1x8x1xf32>
    %123 = arith.mulf %121, %122 : vector<1x8x1xf32>
    %cst_30 = arith.constant 2.000000e+00 : f32
    %124 = vector.broadcast %cst_30 : f32 to vector<1x8x1xf32>
    %125 = arith.subf %124, %123 : vector<1x8x1xf32>
    %126 = arith.mulf %122, %125 : vector<1x8x1xf32>
    %127 = vector.broadcast %126 : vector<1x8x1xf32> to vector<1x8x8xf32>
    %128 = arith.mulf %119, %127 : vector<1x8x8xf32>
    %129 = arith.addf %109, %128 : vector<1x8x8xf32>
    %130 = vector.extract_strided_slice %7 {offsets = [0, 192], sizes = [8, 32], strides = [1, 1]} : vector<8x256xf32> to vector<8x32xf32>
    %131 = vector.shape_cast %130 : vector<8x32xf32> to vector<1x8x32xf32>
    %132 = vector.extract_strided_slice %8 {offsets = [0, 192], sizes = [8, 32], strides = [1, 1]} : vector<8x256xf32> to vector<8x32xf32>
    %133 = vector.shape_cast %132 : vector<8x32xf32> to vector<1x8x32xf32>
    %cst_31 = arith.constant dense<0.000000e+00> : vector<1x8x8xf32>
    %134 = tpu.matmul %131, %133, %cst_31 {dimension_numbers = #tpu.dot_dimension_numbers<[2], [2], [1], [1], [0, 0, 0, 1, 1, 1], [0], [0]>} : vector<1x8x32xf32>, vector<1x8x32xf32>, vector<1x8x8xf32> -> vector<1x8x8xf32>
    %cst_32 = arith.constant dense<0xFF800000> : vector<1x8xf32>
    %135 = vector.multi_reduction <maximumf>, %134, %cst_32 [2] : vector<1x8x8xf32> to vector<1x8xf32>
    %136 = vector.shape_cast %135 : vector<1x8xf32> to vector<1x8x1xf32>
    %137 = vector.broadcast %136 : vector<1x8x1xf32> to vector<1x8x8xf32>
    %138 = arith.subf %134, %137 : vector<1x8x8xf32>
    %139 = math.exp %138 : vector<1x8x8xf32>
    %cst_33 = arith.constant dense<0.000000e+00> : vector<1x8xf32>
    %140 = vector.multi_reduction <add>, %139, %cst_33 [2] : vector<1x8x8xf32> to vector<1x8xf32>
    %141 = vector.shape_cast %140 : vector<1x8xf32> to vector<1x8x1xf32>
    %142 = tpu.reciprocal %141 {approx = true} : vector<1x8x1xf32> -> vector<1x8x1xf32>
    %143 = arith.mulf %141, %142 : vector<1x8x1xf32>
    %cst_34 = arith.constant 2.000000e+00 : f32
    %144 = vector.broadcast %cst_34 : f32 to vector<1x8x1xf32>
    %145 = arith.subf %144, %143 : vector<1x8x1xf32>
    %146 = arith.mulf %142, %145 : vector<1x8x1xf32>
    %147 = vector.broadcast %146 : vector<1x8x1xf32> to vector<1x8x8xf32>
    %148 = arith.mulf %139, %147 : vector<1x8x8xf32>
    %149 = arith.addf %129, %148 : vector<1x8x8xf32>
    %150 = vector.extract_strided_slice %7 {offsets = [0, 224], sizes = [8, 32], strides = [1, 1]} : vector<8x256xf32> to vector<8x32xf32>
    %151 = vector.shape_cast %150 : vector<8x32xf32> to vector<1x8x32xf32>
    %152 = vector.extract_strided_slice %8 {offsets = [0, 224], sizes = [8, 32], strides = [1, 1]} : vector<8x256xf32> to vector<8x32xf32>
    %153 = vector.shape_cast %152 : vector<8x32xf32> to vector<1x8x32xf32>
    %cst_35 = arith.constant dense<0.000000e+00> : vector<1x8x8xf32>
    %154 = tpu.matmul %151, %153, %cst_35 {dimension_numbers = #tpu.dot_dimension_numbers<[2], [2], [1], [1], [0, 0, 0, 1, 1, 1], [0], [0]>} : vector<1x8x32xf32>, vector<1x8x32xf32>, vector<1x8x8xf32> -> vector<1x8x8xf32>
    %cst_36 = arith.constant dense<0xFF800000> : vector<1x8xf32>
    %155 = vector.multi_reduction <maximumf>, %154, %cst_36 [2] : vector<1x8x8xf32> to vector<1x8xf32>
    %156 = vector.shape_cast %155 : vector<1x8xf32> to vector<1x8x1xf32>
    %157 = vector.broadcast %156 : vector<1x8x1xf32> to vector<1x8x8xf32>
    %158 = arith.subf %154, %157 : vector<1x8x8xf32>
    %159 = math.exp %158 : vector<1x8x8xf32>
    %cst_37 = arith.constant dense<0.000000e+00> : vector<1x8xf32>
    %160 = vector.multi_reduction <add>, %159, %cst_37 [2] : vector<1x8x8xf32> to vector<1x8xf32>
    %161 = vector.shape_cast %160 : vector<1x8xf32> to vector<1x8x1xf32>
    %162 = tpu.reciprocal %161 {approx = true} : vector<1x8x1xf32> -> vector<1x8x1xf32>
    %163 = arith.mulf %161, %162 : vector<1x8x1xf32>
    %cst_38 = arith.constant 2.000000e+00 : f32
    %164 = vector.broadcast %cst_38 : f32 to vector<1x8x1xf32>
    %165 = arith.subf %164, %163 : vector<1x8x1xf32>
    %166 = arith.mulf %162, %165 : vector<1x8x1xf32>
    %167 = vector.broadcast %166 : vector<1x8x1xf32> to vector<1x8x8xf32>
    %168 = arith.mulf %159, %167 : vector<1x8x8xf32>
    %169 = arith.addf %149, %168 : vector<1x8x8xf32>
    %c1_i32 = arith.constant 1 : i32
    %170 = arith.muli %arg0, %c1_i32 : i32
    %171 = tpu.iota {dimensions = array<i32: 0>} : vector<1x1x1xi32>
    %172 = vector.broadcast %170 : i32 to vector<1x1x1xi32>
    %173 = arith.addi %171, %172 : vector<1x1x1xi32>
    %c2_i32 = arith.constant 2 : i32
    %174 = vector.broadcast %c2_i32 : i32 to vector<1x1x1xi32>
    %175 = arith.cmpi slt, %173, %174 : vector<1x1x1xi32>
    %176 = arith.extui %175 : vector<1x1x1xi1> to vector<1x1x1xi32>
    %177 = arith.sitofp %176 : vector<1x1x1xi32> to vector<1x1x1xf32>
    %178 = vector.broadcast %177 : vector<1x1x1xf32> to vector<1x8x8xf32>
    %179 = arith.mulf %169, %178 : vector<1x8x8xf32>
    %cst_39 = arith.constant dense<0.000000e+00> : vector<8x8xf32>
    %180 = vector.multi_reduction <add>, %179, %cst_39 [0] : vector<1x8x8xf32> to vector<8x8xf32>
    %cst_40 = arith.constant 1.250000e-01 : f32
    %181 = vector.broadcast %cst_40 : f32 to vector<8x8xf32>
    %182 = arith.mulf %180, %181 : vector<8x8xf32>
    %c0_41 = arith.constant 0 : index
    %c0_42 = arith.constant 0 : index
    %c0_43 = arith.constant 0 : index
    %183 = vector.load %arg4[%c0_41, %c0_42, %c0_43] : memref<1x8x8xf32, #tpu.memory_space<vmem>>, vector<1x8x8xf32>
    %184 = vector.shape_cast %183 : vector<1x8x8xf32> to vector<8x8xf32>
    %185 = vector.shape_cast %182 : vector<8x8xf32> to vector<1x8x8xf32>
    tpu.vector_store %arg4[%c0_41, %c0_42, %c0_43], %185 {strides = array<i32>} : memref<1x8x8xf32, #tpu.memory_space<vmem>>, vector<1x8x8xf32>,
    return
  }
  func.func @transform_0(%arg0: i32) -> (i32, i32, i32) {
    %c0_i32 = arith.constant 0 : i32
    %c0_i32_0 = arith.constant 0 : i32
    %c0_i32_1 = arith.constant 0 : i32
    return %arg0, %c0_i32, %c0_i32_0 : i32, i32, i32
  }
  func.func @transform_1(%arg0: i32) -> (i32, i32) {
    %c0_i32 = arith.constant 0 : i32
    %c0_i32_0 = arith.constant 0 : i32
    %c0_i32_1 = arith.constant 0 : i32
    return %c0_i32, %c0_i32_0 : i32, i32
  }
  func.func @transform_2(%arg0: i32) -> (i32, i32) {
    %c0_i32 = arith.constant 0 : i32
    %c0_i32_0 = arith.constant 0 : i32
    %c0_i32_1 = arith.constant 0 : i32
    return %c0_i32, %c0_i32_0 : i32, i32
  }
  func.func @transform_3(%arg0: i32) -> (i32, i32, i32) {
    %c0_i32 = arith.constant 0 : i32
    %c0_i32_0 = arith.constant 0 : i32
    %c0_i32_1 = arith.constant 0 : i32
    return %arg0, %c0_i32, %c0_i32_0 : i32, i32, i32
  }
}

</mosaic_0001>

<llo_original>
// kernel: tpu_custom_call.1
$region0: #{tpu_custom_call.1}
  #allocation0 [shape = 'u32[]', space=smem, size = 0x4, offset = 0x4, fixed_abs, tag = 'smem constant byte address 0x4 - core index']
  #allocation1 [shape = 'u32[72,128]{1,0:T(1,128)}', space=vmem, size = 0x9000, scoped, tag = 'internal scratch']
  %s0 = inlined_call_operand.hbm [shape: f32[2,8,256], index: 0, kind: input, shape index: {}]
  %s1 = inlined_call_operand.hbm [shape: f32[256,512], index: 1, kind: input, shape index: {}]
  %s2 = inlined_call_operand.hbm [shape: f32[1,512], index: 2, kind: input, shape index: {}]
  %s3 = inlined_call_operand.hbm [shape: f32[2,8,8], index: 3, kind: output, shape index: {}]
  %s4 = sld [smem:[#allocation0]]
  $region57: #{tpu_custom_call.1} parent=0
    _
  %s6 = ssub.s32 1, %s4
  %s7 = scalar_select 0, %s6, %s4
  $region1: #{tpu_custom_call.1} parent=0
    #allocation2 [shape = 'u8[16384]{0}', space=vmem, size = 0x4000, scoped, tag = 'input window, operand 0']
    #allocation3 [shape = 's32[2]{0}', space=sflag, size = 0x8, scoped, tag = 'scoped memory for tpu_custom_call.1']
    #allocation4 [shape = 's32[2]{0}', space=sflag, size = 0x8, scoped, tag = 'scoped memory for tpu_custom_call.1']
    #allocation5 [shape = 'u8[524288]{0}', space=vmem, size = 0x80000, scoped, tag = 'input window, operand 1, single buffered']
    #allocation6 [shape = 's32[1]{0}', space=sflag, size = 0x4, scoped, tag = 'scoped memory for tpu_custom_call.1']
    #allocation7 [shape = 'u8[2048]{0}', space=vmem, size = 0x800, scoped, tag = 'input window, operand 2, single buffered']
    #allocation8 [shape = 'u8[8192]{0}', space=vmem, size = 0x2000, scoped, tag = 'output window, operand 0']
    %8 = vsyncpa [#allocation3], 0
    %s9 = scalar_lea.sflag [#allocation3], 1
    %10 = vsyncpa %s9, 0
    %11 = vsyncpa [#allocation6], 0
    %12 = vsyncpa [#allocation4], 0
    %s13 = scalar_lea.sflag [#allocation4], 1
    %14 = vsyncpa %s13, 0
    loop: start=0, step=1, limit=4
    $region2: #{tpu_custom_call.1} parent=1 // loop_pre_header
      _
    $region3: #{tpu_custom_call.1} parent=1 // loop_header
      %s16 = sphi 0, %s20
      %p17 = scmp.ge.s32.totalorder %s16, 4
      %s26 = sphi 0, %s28
      %s29 = sphi 0, %s26
      %s30 = sphi 0, %s29
      %s46 = sphi 0, %s30
      %s50 = sphi 0, %s50
      %s52 = sphi 0, %s50
      %s53 = sphi 0, %s52
      %s67 = sphi 0, %s53
      %s71 = sphi 0, %s71
      %s73 = sphi 0, %s71
      %s74 = sphi 0, %s73
      %s88 = sphi 0, %s74
      %s94 = sphi 0, %s96
      %s97 = sphi 0, %s94
      %s98 = sphi 0, %s97
      %s114 = sphi 0, %s98
    $region4: #{tpu_custom_call.1} parent=1 // loop_header_branch
      %19 = sbr.rel (%p17) target = $region8
    $region5: #{tpu_custom_call.1} parent=1 // loop_body
      %s21 = ssub.s32 %s16, 1
      %s22 = ssub.s32 %s16, 2
      %s23 = sadd.s32 %s16, 1
      %s24 = ssub.s32 %s16, %s23
      %p25 = scmp.eq.s32.totalorder %s24, 0
      %s27 = sadd.s32 %s26, 1
      %s28 = scalar_select %p25, %s26, %s27
      %p31 = pneg %p25
      %p32 = scmp.eq.s32.totalorder %s16, 1
      %p33 = por %p31, %p32
      %p34 = scmp.ne.s32.totalorder %s26, %s29
      %p35 = scmp.eq.s32.totalorder %s16, 0
      %p36 = por %p34, %p35
      %p37 = scmp.ne.s32.totalorder %s26, %s29
      %p38 = scmp.eq.s32.totalorder %s21, 1
      %p39 = por %p37, %p38
      %p40 = scmp.ne.s32.totalorder %s29, %s30
      %p41 = scmp.eq.s32.totalorder %s21, 0
      %p42 = por %p40, %p41
      %p43 = scmp.ne.s32.totalorder %s29, %s30
      %p44 = scmp.eq.s32.totalorder %s22, 1
      %p45 = por %p43, %p44
      %p47 = scmp.ne.s32.totalorder %s30, %s46
      %p48 = scmp.eq.s32.totalorder %s22, 0
      %p49 = por %p47, %p48
      %s51 = sadd.s32 %s50, 1
      %p54 = scmp.eq.s32.totalorder %s16, 1
      %p55 = scmp.ne.s32.totalorder %s50, %s52
      %p56 = scmp.eq.s32.totalorder %s16, 0
      %p57 = por %p55, %p56
      %p58 = scmp.ne.s32.totalorder %s50, %s52
      %p59 = scmp.eq.s32.totalorder %s21, 1
      %p60 = por %p58, %p59
      %p61 = scmp.ne.s32.totalorder %s52, %s53
      %p62 = scmp.eq.s32.totalorder %s21, 0
      %p63 = por %p61, %p62
      %p64 = scmp.ne.s32.totalorder %s52, %s53
      %p65 = scmp.eq.s32.totalorder %s22, 1
      %p66 = por %p64, %p65
      %p68 = scmp.ne.s32.totalorder %s53, %s67
      %p69 = scmp.eq.s32.totalorder %s22, 0
      %p70 = por %p68, %p69
      %s72 = sadd.s32 %s71, 1
      %p75 = scmp.eq.s32.totalorder %s16, 1
      %p76 = scmp.ne.s32.totalorder %s71, %s73
      %p77 = scmp.eq.s32.totalorder %s16, 0
      %p78 = por %p76, %p77
      %p79 = scmp.ne.s32.totalorder %s71, %s73
      %p80 = scmp.eq.s32.totalorder %s21, 1
      %p81 = por %p79, %p80
      %p82 = scmp.ne.s32.totalorder %s73, %s74
      %p83 = scmp.eq.s32.totalorder %s21, 0
      %p84 = por %p82, %p83
      %p85 = scmp.ne.s32.totalorder %s73, %s74
      %p86 = scmp.eq.s32.totalorder %s22, 1
      %p87 = por %p85, %p86
      %p89 = scmp.ne.s32.totalorder %s74, %s88
      %p90 = scmp.eq.s32.totalorder %s22, 0
      %p91 = por %p89, %p90
      %s92 = ssub.s32 %s16, %s23
      %p93 = scmp.eq.s32.totalorder %s92, 0
      %s95 = sadd.s32 %s94, 1
      %s96 = scalar_select %p93, %s94, %s95
      %p99 = pneg %p93
      %p100 = scmp.eq.s32.totalorder %s16, 1
      %p101 = por %p99, %p100
      %p102 = scmp.ne.s32.totalorder %s94, %s97
      %p103 = scmp.eq.s32.totalorder %s16, 0
      %p104 = por %p102, %p103
      %p105 = scmp.ne.s32.totalorder %s94, %s97
      %p106 = scmp.eq.s32.totalorder %s21, 1
      %p107 = por %p105, %p106
      %p108 = scmp.ne.s32.totalorder %s97, %s98
      %p109 = scmp.eq.s32.totalorder %s21, 0
      %p110 = por %p108, %p109
      %p111 = scmp.ne.s32.totalorder %s97, %s98
      %p112 = scmp.eq.s32.totalorder %s22, 1
      %p113 = por %p111, %p112
      %p115 = scmp.ne.s32.totalorder %s98, %s114
      %p116 = scmp.eq.s32.totalorder %s22, 0
      %p117 = por %p115, %p116
      %p118 = scmp.le.s32.totalorder 1, %s16
      %p119 = scmp.lt.s32.totalorder %s16, 3
      %p120 = pnand %p118, %p119
      %p121 = pneg %p120
      // Predicated region
      $region9: #{tpu_custom_call.1} parent=5 // pred_check
        _
      $region10: #{tpu_custom_call.1} parent=5 // pred_check_branch
        %123 = sbr.rel (%p120) target = $region12
      $region11: #{tpu_custom_call.1} parent=5 // pred_region
        %s124 = ssub.s32 %s16, 1
        // Predicated region
        $region13: #{tpu_custom_call.1} parent=11 // pred_check
          %p125 = pneg %p63
        $region14: #{tpu_custom_call.1} parent=11 // pred_check_branch
          %127 = sbr.rel (%p125) target = $region16
        $region15: #{tpu_custom_call.1} parent=11 // pred_region
          %129 = vsyncadd [#allocation6], 0
          %s130 = sshll.u32 %s1, 4
          %s131 = int_to_ptr.hbm [resolvable:$true] %s130
          %s132 = sshll.u32 [#allocation5], 4
          %s133 = int_to_ptr.vmem [resolvable:$true] %s132
          %138 = dma.hbm_to_vmem [thread:$0]  %s131, 16384, %s133, [#allocation6], 512, 512, 32
        $region16: #{tpu_custom_call.1} parent=11 // pred_fallthru
          _
        // Predicated region
        $region17: #{tpu_custom_call.1} parent=11 // pred_check
          %p139 = pneg %p84
        $region18: #{tpu_custom_call.1} parent=11 // pred_check_branch
          %141 = sbr.rel (%p139) target = $region20
        $region19: #{tpu_custom_call.1} parent=11 // pred_region
          %143 = vsyncadd [#allocation6], 0
          %s145 = sshll.u32 %s2, 4
          %s146 = int_to_ptr.hbm [resolvable:$true] %s145
          %s147 = sshll.u32 [#allocation7], 4
          %s148 = int_to_ptr.vmem [resolvable:$true] %s147
          %150 = dma.hbm_to_vmem [thread:$0]  %s146, 64, %s148, [#allocation6]
        $region20: #{tpu_custom_call.1} parent=11 // pred_fallthru
          _
      $region12: #{tpu_custom_call.1} parent=5 // pred_fallthru
        _
      %p151 = scmp.lt.s32.totalorder %s16, 2
      // Predicated region
      $region21: #{tpu_custom_call.1} parent=5 // pred_check
        %p152 = pneg %p151
      $region22: #{tpu_custom_call.1} parent=5 // pred_check_branch
        %154 = sbr.rel (%p152) target = $region24
      $region23: #{tpu_custom_call.1} parent=5 // pred_region
        // Predicated region
        $region25: #{tpu_custom_call.1} parent=23 // pred_check
          %p155 = pneg %p36
        $region26: #{tpu_custom_call.1} parent=23 // pred_check_branch
          %157 = sbr.rel (%p155) target = $region28
        $region27: #{tpu_custom_call.1} parent=23 // pred_region
          %s158 = sand.u32 %s26, 1
          %s159 = scalar_lea.sflag [#allocation3], %s158
          %s160 = sand.u32 %s26, 1
          %s161 = smul.addr %s160, 16
          %s162 = scalar_lea.vmem [#allocation2], %s161
          %164 = vsyncadd %s159, 0
          %s165 = smul.addr %s16, 2
          %s166 = smul.addr %s165, 8
          %s167 = scalar_lea.hbm %s0, %s166
          %s169 = sshll.u32 %s167, 4
          %s170 = int_to_ptr.hbm [resolvable:$true] %s169
          %s171 = sshll.u32 %s162, 4
          %s172 = int_to_ptr.vmem [resolvable:$true] %s171
          %174 = dma.hbm_to_vmem [thread:$0]  %s170, 256, %s172, %s159
        $region28: #{tpu_custom_call.1} parent=23 // pred_fallthru
          _
      $region24: #{tpu_custom_call.1} parent=5 // pred_fallthru
        _
      %p175 = scmp.le.s32.totalorder 1, %s16
      %p176 = scmp.lt.s32.totalorder %s16, 3
      %p177 = pnand %p175, %p176
      %p178 = pneg %p177
      // Predicated region
      $region29: #{tpu_custom_call.1} parent=5 // pred_check
        _
      $region30: #{tpu_custom_call.1} parent=5 // pred_check_branch
        %180 = sbr.rel (%p177) target = $region32
      $region31: #{tpu_custom_call.1} parent=5 // pred_region
        %s181 = ssub.s32 %s16, 1
        %s182 = sand.u32 %s29, 1
        %s183 = scalar_lea.sflag [#allocation3], %s182
        %s184 = sand.u32 %s29, 1
        %s185 = smul.addr %s184, 16
        %s186 = scalar_lea.vmem [#allocation2], %s185
        // Predicated region
        $region33: #{tpu_custom_call.1} parent=31 // pred_check
          %p187 = pneg %p42
        $region34: #{tpu_custom_call.1} parent=31 // pred_check_branch
          %189 = sbr.rel (%p187) target = $region36
        $region35: #{tpu_custom_call.1} parent=31 // pred_region
          %191 = dma.done %s183, 256
        $region36: #{tpu_custom_call.1} parent=31 // pred_fallthru
          _
        // Predicated region
        $region37: #{tpu_custom_call.1} parent=31 // pred_check
          %p192 = pneg %p63
        $region38: #{tpu_custom_call.1} parent=31 // pred_check_branch
          %194 = sbr.rel (%p192) target = $region40
        $region39: #{tpu_custom_call.1} parent=31 // pred_region
          %196 = dma.done [#allocation6], 16384
        $region40: #{tpu_custom_call.1} parent=31 // pred_fallthru
          _
        // Predicated region
        $region41: #{tpu_custom_call.1} parent=31 // pred_check
          %p197 = pneg %p84
        $region42: #{tpu_custom_call.1} parent=31 // pred_check_branch
          %199 = sbr.rel (%p197) target = $region44
        $region43: #{tpu_custom_call.1} parent=31 // pred_region
          %201 = dma.done [#allocation6], 64
        $region44: #{tpu_custom_call.1} parent=31 // pred_fallthru
          _
        %s202 = sand.u32 %s29, 1
        %s203 = scalar_lea.sflag [#allocation3], %s202
        %s204 = sand.u32 %s29, 1
        %s205 = smul.addr %s204, 16
        %s206 = scalar_lea.vmem [#allocation2], %s205
        %p207 = pneg %p42
        %p208 = pneg %p39
        %p209 = pneg %p63
        %p210 = pneg %p60
        %p211 = pneg %p84
        %p212 = pneg %p81
        %p213 = pneg %p110
        %p214 = pneg %p107
        %s215 = sand.u32 %s97, 1
        %s216 = scalar_lea.sflag [#allocation4], %s215
        %s217 = sand.u32 %s97, 1
        %s218 = smul.addr %s217, 8
        %s219 = scalar_lea.vmem [#allocation8], %s218
        %v220 = vld [vmem:[%s186] sm:$0xff]
        %v221 = vld [vmem:[%s186 + $0x8] sm:$0xff]
        %v222 = vld [vmem:[#allocation5] sm:$0xff]
        %v223 = vld [vmem:[#allocation5 + $0x8] sm:$0xff]
        %v224 = vld [vmem:[#allocation5 + $0x10] sm:$0xff]
        %v225 = vld [vmem:[#allocation5 + $0x18] sm:$0xff]
        %v226 = vld [vmem:[#allocation5 + $0x20] sm:$0xff]
        %v227 = vld [vmem:[#allocation5 + $0x28] sm:$0xff]
        %v228 = vld [vmem:[#allocation5 + $0x30] sm:$0xff]
        %v229 = vld [vmem:[#allocation5 + $0x38] sm:$0xff]
        %v230 = vld [vmem:[#allocation5 + $0x40] sm:$0xff]
        %v231 = vld [vmem:[#allocation5 + $0x48] sm:$0xff]
        %v232 = vld [vmem:[#allocation5 + $0x50] sm:$0xff]
        %v233 = vld [vmem:[#allocation5 + $0x58] sm:$0xff]
        %v234 = vld [vmem:[#allocation5 + $0x60] sm:$0xff]
        %v235 = vld [vmem:[#allocation5 + $0x68] sm:$0xff]
        %v236 = vld [vmem:[#allocation5 + $0x70] sm:$0xff]
        %v237 = vld [vmem:[#allocation5 + $0x78] sm:$0xff]
        %v238 = vld [vmem:[#allocation5 + $0x80] sm:$0xff]
        %v239 = vld [vmem:[#allocation5 + $0x88] sm:$0xff]
        %v240 = vld [vmem:[#allocation5 + $0x90] sm:$0xff]
        %v241 = vld [vmem:[#allocation5 + $0x98] sm:$0xff]
        %v242 = vld [vmem:[#allocation5 + $0xa0] sm:$0xff]
        %v243 = vld [vmem:[#allocation5 + $0xa8] sm:$0xff]
        %v244 = vld [vmem:[#allocation5 + $0xb0] sm:$0xff]
        %v245 = vld [vmem:[#allocation5 + $0xb8] sm:$0xff]
        %v246 = vld [vmem:[#allocation5 + $0xc0] sm:$0xff]
        %v247 = vld [vmem:[#allocation5 + $0xc8] sm:$0xff]
        %v248 = vld [vmem:[#allocation5 + $0xd0] sm:$0xff]
        %v249 = vld [vmem:[#allocation5 + $0xd8] sm:$0xff]
        %v250 = vld [vmem:[#allocation5 + $0xe0] sm:$0xff]
        %v251 = vld [vmem:[#allocation5 + $0xe8] sm:$0xff]
        %v252 = vld [vmem:[#allocation5 + $0xf0] sm:$0xff]
        %v253 = vld [vmem:[#allocation5 + $0xf8] sm:$0xff]
        %v254 = vld [vmem:[#allocation5 + $0x100] sm:$0xff]
        %v255 = vld [vmem:[#allocation5 + $0x108] sm:$0xff]
        %v256 = vld [vmem:[#allocation5 + $0x110] sm:$0xff]
        %v257 = vld [vmem:[#allocation5 + $0x118] sm:$0xff]
        %v258 = vld [vmem:[#allocation5 + $0x120] sm:$0xff]
        %v259 = vld [vmem:[#allocation5 + $0x128] sm:$0xff]
        %v260 = vld [vmem:[#allocation5 + $0x130] sm:$0xff]
        %v261 = vld [vmem:[#allocation5 + $0x138] sm:$0xff]
        %v262 = vld [vmem:[#allocation5 + $0x140] sm:$0xff]
        %v263 = vld [vmem:[#allocation5 + $0x148] sm:$0xff]
        %v264 = vld [vmem:[#allocation5 + $0x150] sm:$0xff]
        %v265 = vld [vmem:[#allocation5 + $0x158] sm:$0xff]
        %v266 = vld [vmem:[#allocation5 + $0x160] sm:$0xff]
        %v267 = vld [vmem:[#allocation5 + $0x168] sm:$0xff]
        %v268 = vld [vmem:[#allocation5 + $0x170] sm:$0xff]
        %v269 = vld [vmem:[#allocation5 + $0x178] sm:$0xff]
        %v270 = vld [vmem:[#allocation5 + $0x180] sm:$0xff]
        %v271 = vld [vmem:[#allocation5 + $0x188] sm:$0xff]
        %v272 = vld [vmem:[#allocation5 + $0x190] sm:$0xff]
        %v273 = vld [vmem:[#allocation5 + $0x198] sm:$0xff]
        %v274 = vld [vmem:[#allocation5 + $0x1a0] sm:$0xff]
        %v275 = vld [vmem:[#allocation5 + $0x1a8] sm:$0xff]
        %v276 = vld [vmem:[#allocation5 + $0x1b0] sm:$0xff]
        %v277 = vld [vmem:[#allocation5 + $0x1b8] sm:$0xff]
        %v278 = vld [vmem:[#allocation5 + $0x1c0] sm:$0xff]
        %v279 = vld [vmem:[#allocation5 + $0x1c8] sm:$0xff]
        %v280 = vld [vmem:[#allocation5 + $0x1d0] sm:$0xff]
        %v281 = vld [vmem:[#allocation5 + $0x1d8] sm:$0xff]
        %v282 = vld [vmem:[#allocation5 + $0x1e0] sm:$0xff]
        %v283 = vld [vmem:[#allocation5 + $0x1e8] sm:$0xff]
        %v284 = vld [vmem:[#allocation5 + $0x1f0] sm:$0xff]
        %v285 = vld [vmem:[#allocation5 + $0x1f8] sm:$0xff]
        %v286 = vld [vmem:[#allocation5 + $0x200] sm:$0xff]
        %v287 = vld [vmem:[#allocation5 + $0x208] sm:$0xff]
        %v288 = vld [vmem:[#allocation5 + $0x210] sm:$0xff]
        %v289 = vld [vmem:[#allocation5 + $0x218] sm:$0xff]
        %v290 = vld [vmem:[#allocation5 + $0x220] sm:$0xff]
        %v291 = vld [vmem:[#allocation5 + $0x228] sm:$0xff]
        %v292 = vld [vmem:[#allocation5 + $0x230] sm:$0xff]
        %v293 = vld [vmem:[#allocation5 + $0x238] sm:$0xff]
        %v294 = vld [vmem:[#allocation5 + $0x240] sm:$0xff]
        %v295 = vld [vmem:[#allocation5 + $0x248] sm:$0xff]
        %v296 = vld [vmem:[#allocation5 + $0x250] sm:$0xff]
        %v297 = vld [vmem:[#allocation5 + $0x258] sm:$0xff]
        %v298 = vld [vmem:[#allocation5 + $0x260] sm:$0xff]
        %v299 = vld [vmem:[#allocation5 + $0x268] sm:$0xff]
        %v300 = vld [vmem:[#allocation5 + $0x270] sm:$0xff]
        %v301 = vld [vmem:[#allocation5 + $0x278] sm:$0xff]
        %v302 = vld [vmem:[#allocation5 + $0x280] sm:$0xff]
        %v303 = vld [vmem:[#allocation5 + $0x288] sm:$0xff]
        %v304 = vld [vmem:[#allocation5 + $0x290] sm:$0xff]
        %v305 = vld [vmem:[#allocation5 + $0x298] sm:$0xff]
        %v306 = vld [vmem:[#allocation5 + $0x2a0] sm:$0xff]
        %v307 = vld [vmem:[#allocation5 + $0x2a8] sm:$0xff]
        %v308 = vld [vmem:[#allocation5 + $0x2b0] sm:$0xff]
        %v309 = vld [vmem:[#allocation5 + $0x2b8] sm:$0xff]
        %v310 = vld [vmem:[#allocation5 + $0x2c0] sm:$0xff]
        %v311 = vld [vmem:[#allocation5 + $0x2c8] sm:$0xff]
        %v312 = vld [vmem:[#allocation5 + $0x2d0] sm:$0xff]
        %v313 = vld [vmem:[#allocation5 + $0x2d8] sm:$0xff]
        %v314 = vld [vmem:[#allocation5 + $0x2e0] sm:$0xff]
        %v315 = vld [vmem:[#allocation5 + $0x2e8] sm:$0xff]
        %v316 = vld [vmem:[#allocation5 + $0x2f0] sm:$0xff]
        %v317 = vld [vmem:[#allocation5 + $0x2f8] sm:$0xff]
        %v318 = vld [vmem:[#allocation5 + $0x300] sm:$0xff]
        %v319 = vld [vmem:[#allocation5 + $0x308] sm:$0xff]
        %v320 = vld [vmem:[#allocation5 + $0x310] sm:$0xff]
        %v321 = vld [vmem:[#allocation5 + $0x318] sm:$0xff]
        %v322 = vld [vmem:[#allocation5 + $0x320] sm:$0xff]
        %v323 = vld [vmem:[#allocation5 + $0x328] sm:$0xff]
        %v324 = vld [vmem:[#allocation5 + $0x330] sm:$0xff]
        %v325 = vld [vmem:[#allocation5 + $0x338] sm:$0xff]
        %v326 = vld [vmem:[#allocation5 + $0x340] sm:$0xff]
        %v327 = vld [vmem:[#allocation5 + $0x348] sm:$0xff]
        %v328 = vld [vmem:[#allocation5 + $0x350] sm:$0xff]
        %v329 = vld [vmem:[#allocation5 + $0x358] sm:$0xff]
        %v330 = vld [vmem:[#allocation5 + $0x360] sm:$0xff]
        %v331 = vld [vmem:[#allocation5 + $0x368] sm:$0xff]
        %v332 = vld [vmem:[#allocation5 + $0x370] sm:$0xff]
        %v333 = vld [vmem:[#allocation5 + $0x378] sm:$0xff]
        %v334 = vld [vmem:[#allocation5 + $0x380] sm:$0xff]
        %v335 = vld [vmem:[#allocation5 + $0x388] sm:$0xff]
        %v336 = vld [vmem:[#allocation5 + $0x390] sm:$0xff]
        %v337 = vld [vmem:[#allocation5 + $0x398] sm:$0xff]
        %v338 = vld [vmem:[#allocation5 + $0x3a0] sm:$0xff]
        %v339 = vld [vmem:[#allocation5 + $0x3a8] sm:$0xff]
        %v340 = vld [vmem:[#allocation5 + $0x3b0] sm:$0xff]
        %v341 = vld [vmem:[#allocation5 + $0x3b8] sm:$0xff]
        %v342 = vld [vmem:[#allocation5 + $0x3c0] sm:$0xff]
        %v343 = vld [vmem:[#allocation5 + $0x3c8] sm:$0xff]
        %v344 = vld [vmem:[#allocation5 + $0x3d0] sm:$0xff]
        %v345 = vld [vmem:[#allocation5 + $0x3d8] sm:$0xff]
        %v346 = vld [vmem:[#allocation5 + $0x3e0] sm:$0xff]
        %v347 = vld [vmem:[#allocation5 + $0x3e8] sm:$0xff]
        %v348 = vld [vmem:[#allocation5 + $0x3f0] sm:$0xff]
        %v349 = vld [vmem:[#allocation5 + $0x3f8] sm:$0xff]
        %v350 = vld [vmem:[#allocation7] sm:$0xf]
        %v352 = vperm.slane %v350, 0
        %v353 = vperm.slane %v350, 1
        %v354 = vperm.slane %v350, 2
        %v355 = vperm.slane %v350, 3
        %360 = vmatpush.msra.mxu0 %v282
        %361 = vmatpush.msra.mxu0 %v278
        %362 = vmatpush.msra.mxu0 %v274
        %363 = vmatpush.msra.mxu0 %v270
        %364 = vmatpush.msra.mxu0 %v266
        %365 = vmatpush.msra.mxu0 %v262
        %366 = vmatpush.msra.mxu0 %v258
        %367 = vmatpush.msra.mxu0 %v254
        %368 = vmatpush.msra.mxu0 %v250
        %369 = vmatpush.msra.mxu0 %v246
        %370 = vmatpush.msra.mxu0 %v242
        %371 = vmatpush.msra.mxu0 %v238
        %372 = vmatpush.msra.mxu0 %v234
        %373 = vmatpush.msra.mxu0 %v230
        %374 = vmatpush.msra.mxu0 %v226
        %375 = vmatpush.msra.mxu0 %v222
        %376 = vmatmul.f32.gmra.mxu0 %v220
        %v377 = vpop.f32.mrf.mxu0
        %v378 = vadd.f32 %v352, %v377
        %379 = vdwg.mxu0
        %380 = vmatpush.msra.mxu0 %v346
        %381 = vmatpush.msra.mxu0 %v342
        %382 = vmatpush.msra.mxu0 %v338
        %383 = vmatpush.msra.mxu0 %v334
        %384 = vmatpush.msra.mxu0 %v330
        %385 = vmatpush.msra.mxu0 %v326
        %386 = vmatpush.msra.mxu0 %v322
        %387 = vmatpush.msra.mxu0 %v318
        %388 = vmatpush.msra.mxu0 %v314
        %389 = vmatpush.msra.mxu0 %v310
        %390 = vmatpush.msra.mxu0 %v306
        %391 = vmatpush.msra.mxu0 %v302
        %392 = vmatpush.msra.mxu0 %v298
        %393 = vmatpush.msra.mxu0 %v294
        %394 = vmatpush.msra.mxu0 %v290
        %395 = vmatpush.msra.mxu0 %v286
        %396 = vmatmul.f32.gmra.mxu0 %v221
        %v397 = vpop.f32.mrf.mxu0
        %v398 = vadd.f32 %v378, %v397
        %399 = vdwg.mxu0
        %400 = vmatpush.msra.mxu0 %v283
        %401 = vmatpush.msra.mxu0 %v279
        %402 = vmatpush.msra.mxu0 %v275
        %403 = vmatpush.msra.mxu0 %v271
        %404 = vmatpush.msra.mxu0 %v267
        %405 = vmatpush.msra.mxu0 %v263
        %406 = vmatpush.msra.mxu0 %v259
        %407 = vmatpush.msra.mxu0 %v255
        %408 = vmatpush.msra.mxu0 %v251
        %409 = vmatpush.msra.mxu0 %v247
        %410 = vmatpush.msra.mxu0 %v243
        %411 = vmatpush.msra.mxu0 %v239
        %412 = vmatpush.msra.mxu0 %v235
        %413 = vmatpush.msra.mxu0 %v231
        %414 = vmatpush.msra.mxu0 %v227
        %415 = vmatpush.msra.mxu0 %v223
        %416 = vmatmul.f32.gmra.mxu0 %v220
        %v417 = vpop.f32.mrf.mxu0
        %v418 = vadd.f32 %v353, %v417
        %419 = vdwg.mxu0
        %420 = vmatpush.msra.mxu0 %v347
        %421 = vmatpush.msra.mxu0 %v343
        %422 = vmatpush.msra.mxu0 %v339
        %423 = vmatpush.msra.mxu0 %v335
        %424 = vmatpush.msra.mxu0 %v331
        %425 = vmatpush.msra.mxu0 %v327
        %426 = vmatpush.msra.mxu0 %v323
        %427 = vmatpush.msra.mxu0 %v319
        %428 = vmatpush.msra.mxu0 %v315
        %429 = vmatpush.msra.mxu0 %v311
        %430 = vmatpush.msra.mxu0 %v307
        %431 = vmatpush.msra.mxu0 %v303
        %432 = vmatpush.msra.mxu0 %v299
        %433 = vmatpush.msra.mxu0 %v295
        %434 = vmatpush.msra.mxu0 %v291
        %435 = vmatpush.msra.mxu0 %v287
        %436 = vmatmul.f32.gmra.mxu0 %v221
        %v437 = vpop.f32.mrf.mxu0
        %v438 = vadd.f32 %v418, %v437
        %439 = vdwg.mxu0
        %440 = vmatpush.msra.mxu0 %v284
        %441 = vmatpush.msra.mxu0 %v280
        %442 = vmatpush.msra.mxu0 %v276
        %443 = vmatpush.msra.mxu0 %v272
        %444 = vmatpush.msra.mxu0 %v268
        %445 = vmatpush.msra.mxu0 %v264
        %446 = vmatpush.msra.mxu0 %v260
        %447 = vmatpush.msra.mxu0 %v256
        %448 = vmatpush.msra.mxu0 %v252
        %449 = vmatpush.msra.mxu0 %v248
        %450 = vmatpush.msra.mxu0 %v244
        %451 = vmatpush.msra.mxu0 %v240
        %452 = vmatpush.msra.mxu0 %v236
        %453 = vmatpush.msra.mxu0 %v232
        %454 = vmatpush.msra.mxu0 %v228
        %455 = vmatpush.msra.mxu0 %v224
        %456 = vmatmul.f32.gmra.mxu0 %v220
        %v457 = vpop.f32.mrf.mxu0
        %v458 = vadd.f32 %v354, %v457
        %459 = vdwg.mxu0
        %460 = vmatpush.msra.mxu0 %v348
        %461 = vmatpush.msra.mxu0 %v344
        %462 = vmatpush.msra.mxu0 %v340
        %463 = vmatpush.msra.mxu0 %v336
        %464 = vmatpush.msra.mxu0 %v332
        %465 = vmatpush.msra.mxu0 %v328
        %466 = vmatpush.msra.mxu0 %v324
        %467 = vmatpush.msra.mxu0 %v320
        %468 = vmatpush.msra.mxu0 %v316
        %469 = vmatpush.msra.mxu0 %v312
        %470 = vmatpush.msra.mxu0 %v308
        %471 = vmatpush.msra.mxu0 %v304
        %472 = vmatpush.msra.mxu0 %v300
        %473 = vmatpush.msra.mxu0 %v296
        %474 = vmatpush.msra.mxu0 %v292
        %475 = vmatpush.msra.mxu0 %v288
        %476 = vmatmul.f32.gmra.mxu0 %v221
        %v477 = vpop.f32.mrf.mxu0
        %v478 = vadd.f32 %v458, %v477
        %479 = vdwg.mxu0
        %480 = vmatpush.msra.mxu0 %v285
        %481 = vmatpush.msra.mxu0 %v281
        %482 = vmatpush.msra.mxu0 %v277
        %483 = vmatpush.msra.mxu0 %v273
        %484 = vmatpush.msra.mxu0 %v269
        %485 = vmatpush.msra.mxu0 %v265
        %486 = vmatpush.msra.mxu0 %v261
        %487 = vmatpush.msra.mxu0 %v257
        %488 = vmatpush.msra.mxu0 %v253
        %489 = vmatpush.msra.mxu0 %v249
        %490 = vmatpush.msra.mxu0 %v245
        %491 = vmatpush.msra.mxu0 %v241
        %492 = vmatpush.msra.mxu0 %v237
        %493 = vmatpush.msra.mxu0 %v233
        %494 = vmatpush.msra.mxu0 %v229
        %495 = vmatpush.msra.mxu0 %v225
        %496 = vmatmul.f32.gmra.mxu0 %v220
        %v497 = vpop.f32.mrf.mxu0
        %v498 = vadd.f32 %v355, %v497
        %499 = vdwg.mxu0
        %500 = vmatpush.msra.mxu0 %v349
        %501 = vmatpush.msra.mxu0 %v345
        %502 = vmatpush.msra.mxu0 %v341
        %503 = vmatpush.msra.mxu0 %v337
        %504 = vmatpush.msra.mxu0 %v333
        %505 = vmatpush.msra.mxu0 %v329
        %506 = vmatpush.msra.mxu0 %v325
        %507 = vmatpush.msra.mxu0 %v321
        %508 = vmatpush.msra.mxu0 %v317
        %509 = vmatpush.msra.mxu0 %v313
        %510 = vmatpush.msra.mxu0 %v309
        %511 = vmatpush.msra.mxu0 %v305
        %512 = vmatpush.msra.mxu0 %v301
        %513 = vmatpush.msra.mxu0 %v297
        %514 = vmatpush.msra.mxu0 %v293
        %515 = vmatpush.msra.mxu0 %v289
        %516 = vmatmul.f32.gmra.mxu0 %v221
        %v517 = vpop.f32.mrf.mxu0
        %v518 = vadd.f32 %v498, %v517
        %519 = vdwg.mxu0
        %vm520 = vcmask 261120
        %v522 = vsel %vm520, %v398, 0
        %v525 = vsel %vm520, %v478, 0
        %527 = vmatpush.xpose.msra.mxu0 0.0
        %528 = vmatpush.xpose.msra.mxu0 0.0
        %529 = vmatpush.xpose.msra.mxu0 0.0
        %530 = vmatpush.xpose.msra.mxu0 0.0
        %531 = vmatpush.xpose.msra.mxu0 0.0
        %532 = vmatpush.xpose.msra.mxu0 0.0
        %533 = vmatpush.xpose.msra.mxu0 0.0
        %534 = vmatpush.xpose.msra.mxu0 0.0
        %535 = vmatpush.xpose.msra.mxu0 0.0
        %536 = vmatpush.xpose.msra.mxu0 0.0
        %537 = vmatpush.xpose.msra.mxu0 0.0
        %538 = vmatpush.xpose.msra.mxu0 0.0
        %539 = vmatpush.xpose.msra.mxu0 0.0
        %540 = vmatpush.xpose.msra.mxu0 0.0
        %541 = vmatpush.xpose.msra.mxu0 0.0
        %542 = vmatpush.xpose.msra.mxu0 %v525
        %543 = vmatmul.f32.gmra.mxu0 %v522
        %v544 = vpop.f32.mrf.mxu0
        %v545 = vadd.f32 0.0, %v544
        %546 = vdwg.mxu0
        %vm547 = vcmask 64512
        %v548 = vsel %vm547, %v545, -inf
        %549 = vmax.xlane.f32.xlu0 %v548
        %v550 = vpop.xlane.xlu0 %549
        %v551 = vsub.f32 %v545, %v550
        %v552 = vmul.f32 %v551, 1.442695
        %v553 = vpow.pop %v552
        %v554 = vsel %vm547, %v553, 0.0
        %555 = vadd.xlane.f32.xlu0 %v554
        %v556 = vpop.xlane.xlu0 %555
        %v557 = vrcp.pop %v556
        %v558 = vmul.f32 %v556, %v557
        %v559 = vsub.f32 2.0, %v558
        %v560 = vmul.f32 %v557, %v559
        %v561 = vmul.f32 %v553, %v560
        %v562 = vadd.f32 %v561, 0.0
        %563 = vrot.lane.b32.xlu0 %v398, 96
        %v564 = vpop.permute.xlu0 %563
        %565 = vrot.lane.b32.xlu0 %v478, 96
        %v566 = vpop.permute.xlu0 %565
        %v567 = vsel %vm520, %v564, 0
        %v569 = vsel %vm520, %v566, 0
        %571 = vmatpush.xpose.msra.mxu0 0.0
        %572 = vmatpush.xpose.msra.mxu0 0.0
        %573 = vmatpush.xpose.msra.mxu0 0.0
        %574 = vmatpush.xpose.msra.mxu0 0.0
        %575 = vmatpush.xpose.msra.mxu0 0.0
        %576 = vmatpush.xpose.msra.mxu0 0.0
        %577 = vmatpush.xpose.msra.mxu0 0.0
        %578 = vmatpush.xpose.msra.mxu0 0.0
        %579 = vmatpush.xpose.msra.mxu0 0.0
        %580 = vmatpush.xpose.msra.mxu0 0.0
        %581 = vmatpush.xpose.msra.mxu0 0.0
        %582 = vmatpush.xpose.msra.mxu0 0.0
        %583 = vmatpush.xpose.msra.mxu0 0.0
        %584 = vmatpush.xpose.msra.mxu0 0.0
        %585 = vmatpush.xpose.msra.mxu0 0.0
        %586 = vmatpush.xpose.msra.mxu0 %v569
        %587 = vmatmul.f32.gmra.mxu0 %v567
        %v588 = vpop.f32.mrf.mxu0
        %v589 = vadd.f32 0.0, %v588
        %590 = vdwg.mxu0
        %v591 = vsel %vm547, %v589, -inf
        %592 = vmax.xlane.f32.xlu0 %v591
        %v593 = vpop.xlane.xlu0 %592
        %v594 = vsub.f32 %v589, %v593
        %v595 = vmul.f32 %v594, 1.442695
        %v596 = vpow.pop %v595
        %v597 = vsel %vm547, %v596, 0.0
        %598 = vadd.xlane.f32.xlu0 %v597
        %v599 = vpop.xlane.xlu0 %598
        %v600 = vrcp.pop %v599
        %v601 = vmul.f32 %v599, %v600
        %v602 = vsub.f32 2.0, %v601
        %v603 = vmul.f32 %v600, %v602
        %v604 = vmul.f32 %v596, %v603
        %v605 = vadd.f32 %v562, %v604
        %606 = vrot.lane.b32.xlu0 %v398, 64
        %v607 = vpop.permute.xlu0 %606
        %608 = vrot.lane.b32.xlu0 %v478, 64
        %v609 = vpop.permute.xlu0 %608
        %v610 = vsel %vm520, %v607, 0
        %v612 = vsel %vm520, %v609, 0
        %614 = vmatpush.xpose.msra.mxu0 0.0
        %615 = vmatpush.xpose.msra.mxu0 0.0
        %616 = vmatpush.xpose.msra.mxu0 0.0
        %617 = vmatpush.xpose.msra.mxu0 0.0
        %618 = vmatpush.xpose.msra.mxu0 0.0
        %619 = vmatpush.xpose.msra.mxu0 0.0
        %620 = vmatpush.xpose.msra.mxu0 0.0
        %621 = vmatpush.xpose.msra.mxu0 0.0
        %622 = vmatpush.xpose.msra.mxu0 0.0
        %623 = vmatpush.xpose.msra.mxu0 0.0
        %624 = vmatpush.xpose.msra.mxu0 0.0
        %625 = vmatpush.xpose.msra.mxu0 0.0
        %626 = vmatpush.xpose.msra.mxu0 0.0
        %627 = vmatpush.xpose.msra.mxu0 0.0
        %628 = vmatpush.xpose.msra.mxu0 0.0
        %629 = vmatpush.xpose.msra.mxu0 %v612
        %630 = vmatmul.f32.gmra.mxu0 %v610
        %v631 = vpop.f32.mrf.mxu0
        %v632 = vadd.f32 0.0, %v631
        %633 = vdwg.mxu0
        %v634 = vsel %vm547, %v632, -inf
        %635 = vmax.xlane.f32.xlu0 %v634
        %v636 = vpop.xlane.xlu0 %635
        %v637 = vsub.f32 %v632, %v636
        %v638 = vmul.f32 %v637, 1.442695
        %v639 = vpow.pop %v638
        %v640 = vsel %vm547, %v639, 0.0
        %641 = vadd.xlane.f32.xlu0 %v640
        %v642 = vpop.xlane.xlu0 %641
        %v643 = vrcp.pop %v642
        %v644 = vmul.f32 %v642, %v643
        %v645 = vsub.f32 2.0, %v644
        %v646 = vmul.f32 %v643, %v645
        %v647 = vmul.f32 %v639, %v646
        %v648 = vadd.f32 %v605, %v647
        %649 = vrot.lane.b32.xlu0 %v398, 32
        %v650 = vpop.permute.xlu0 %649
        %651 = vrot.lane.b32.xlu0 %v478, 32
        %v652 = vpop.permute.xlu0 %651
        %v653 = vsel %vm520, %v650, 0
        %v655 = vsel %vm520, %v652, 0
        %657 = vmatpush.xpose.msra.mxu0 0.0
        %658 = vmatpush.xpose.msra.mxu0 0.0
        %659 = vmatpush.xpose.msra.mxu0 0.0
        %660 = vmatpush.xpose.msra.mxu0 0.0
        %661 = vmatpush.xpose.msra.mxu0 0.0
        %662 = vmatpush.xpose.msra.mxu0 0.0
        %663 = vmatpush.xpose.msra.mxu0 0.0
        %664 = vmatpush.xpose.msra.mxu0 0.0
        %665 = vmatpush.xpose.msra.mxu0 0.0
        %666 = vmatpush.xpose.msra.mxu0 0.0
        %667 = vmatpush.xpose.msra.mxu0 0.0
        %668 = vmatpush.xpose.msra.mxu0 0.0
        %669 = vmatpush.xpose.msra.mxu0 0.0
        %670 = vmatpush.xpose.msra.mxu0 0.0
        %671 = vmatpush.xpose.msra.mxu0 0.0
        %672 = vmatpush.xpose.msra.mxu0 %v655
        %673 = vmatmul.f32.gmra.mxu0 %v653
        %v674 = vpop.f32.mrf.mxu0
        %v675 = vadd.f32 0.0, %v674
        %676 = vdwg.mxu0
        %v677 = vsel %vm547, %v675, -inf
        %678 = vmax.xlane.f32.xlu0 %v677
        %v679 = vpop.xlane.xlu0 %678
        %v680 = vsub.f32 %v675, %v679
        %v681 = vmul.f32 %v680, 1.442695
        %v682 = vpow.pop %v681
        %v683 = vsel %vm547, %v682, 0.0
        %684 = vadd.xlane.f32.xlu0 %v683
        %v685 = vpop.xlane.xlu0 %684
        %v686 = vrcp.pop %v685
        %v687 = vmul.f32 %v685, %v686
        %v688 = vsub.f32 2.0, %v687
        %v689 = vmul.f32 %v686, %v688
        %v690 = vmul.f32 %v682, %v689
        %v691 = vadd.f32 %v648, %v690
        %v693 = vsel %vm520, %v438, 0
        %v696 = vsel %vm520, %v518, 0
        %698 = vmatpush.xpose.msra.mxu0 0.0
        %699 = vmatpush.xpose.msra.mxu0 0.0
        %700 = vmatpush.xpose.msra.mxu0 0.0
        %701 = vmatpush.xpose.msra.mxu0 0.0
        %702 = vmatpush.xpose.msra.mxu0 0.0
        %703 = vmatpush.xpose.msra.mxu0 0.0
        %704 = vmatpush.xpose.msra.mxu0 0.0
        %705 = vmatpush.xpose.msra.mxu0 0.0
        %706 = vmatpush.xpose.msra.mxu0 0.0
        %707 = vmatpush.xpose.msra.mxu0 0.0
        %708 = vmatpush.xpose.msra.mxu0 0.0
        %709 = vmatpush.xpose.msra.mxu0 0.0
        %710 = vmatpush.xpose.msra.mxu0 0.0
        %711 = vmatpush.xpose.msra.mxu0 0.0
        %712 = vmatpush.xpose.msra.mxu0 0.0
        %713 = vmatpush.xpose.msra.mxu0 %v696
        %714 = vmatmul.f32.gmra.mxu0 %v693
        %v715 = vpop.f32.mrf.mxu0
        %v716 = vadd.f32 0.0, %v715
        %717 = vdwg.mxu0
        %v718 = vsel %vm547, %v716, -inf
        %719 = vmax.xlane.f32.xlu0 %v718
        %v720 = vpop.xlane.xlu0 %719
        %v721 = vsub.f32 %v716, %v720
        %v722 = vmul.f32 %v721, 1.442695
        %v723 = vpow.pop %v722
        %v724 = vsel %vm547, %v723, 0.0
        %725 = vadd.xlane.f32.xlu0 %v724
        %v726 = vpop.xlane.xlu0 %725
        %v727 = vrcp.pop %v726
        %v728 = vmul.f32 %v726, %v727
        %v729 = vsub.f32 2.0, %v728
        %v730 = vmul.f32 %v727, %v729
        %v731 = vmul.f32 %v723, %v730
        %v732 = vadd.f32 %v691, %v731
        %733 = vrot.lane.b32.xlu0 %v438, 96
        %v734 = vpop.permute.xlu0 %733
        %735 = vrot.lane.b32.xlu0 %v518, 96
        %v736 = vpop.permute.xlu0 %735
        %v737 = vsel %vm520, %v734, 0
        %v739 = vsel %vm520, %v736, 0
        %741 = vmatpush.xpose.msra.mxu0 0.0
        %742 = vmatpush.xpose.msra.mxu0 0.0
        %743 = vmatpush.xpose.msra.mxu0 0.0
        %744 = vmatpush.xpose.msra.mxu0 0.0
        %745 = vmatpush.xpose.msra.mxu0 0.0
        %746 = vmatpush.xpose.msra.mxu0 0.0
        %747 = vmatpush.xpose.msra.mxu0 0.0
        %748 = vmatpush.xpose.msra.mxu0 0.0
        %749 = vmatpush.xpose.msra.mxu0 0.0
        %750 = vmatpush.xpose.msra.mxu0 0.0
        %751 = vmatpush.xpose.msra.mxu0 0.0
        %752 = vmatpush.xpose.msra.mxu0 0.0
        %753 = vmatpush.xpose.msra.mxu0 0.0
        %754 = vmatpush.xpose.msra.mxu0 0.0
        %755 = vmatpush.xpose.msra.mxu0 0.0
        %756 = vmatpush.xpose.msra.mxu0 %v739
        %757 = vmatmul.f32.gmra.mxu0 %v737
        %v758 = vpop.f32.mrf.mxu0
        %v759 = vadd.f32 0.0, %v758
        %760 = vdwg.mxu0
        %v761 = vsel %vm547, %v759, -inf
        %762 = vmax.xlane.f32.xlu0 %v761
        %v763 = vpop.xlane.xlu0 %762
        %v764 = vsub.f32 %v759, %v763
        %v765 = vmul.f32 %v764, 1.442695
        %v766 = vpow.pop %v765
        %v767 = vsel %vm547, %v766, 0.0
        %768 = vadd.xlane.f32.xlu0 %v767
        %v769 = vpop.xlane.xlu0 %768
        %v770 = vrcp.pop %v769
        %v771 = vmul.f32 %v769, %v770
        %v772 = vsub.f32 2.0, %v771
        %v773 = vmul.f32 %v770, %v772
        %v774 = vmul.f32 %v766, %v773
        %v775 = vadd.f32 %v732, %v774
        %776 = vrot.lane.b32.xlu0 %v438, 64
        %v777 = vpop.permute.xlu0 %776
        %778 = vrot.lane.b32.xlu0 %v518, 64
        %v779 = vpop.permute.xlu0 %778
        %v780 = vsel %vm520, %v777, 0
        %v782 = vsel %vm520, %v779, 0
        %784 = vmatpush.xpose.msra.mxu0 0.0
        %785 = vmatpush.xpose.msra.mxu0 0.0
        %786 = vmatpush.xpose.msra.mxu0 0.0
        %787 = vmatpush.xpose.msra.mxu0 0.0
        %788 = vmatpush.xpose.msra.mxu0 0.0
        %789 = vmatpush.xpose.msra.mxu0 0.0
        %790 = vmatpush.xpose.msra.mxu0 0.0
        %791 = vmatpush.xpose.msra.mxu0 0.0
        %792 = vmatpush.xpose.msra.mxu0 0.0
        %793 = vmatpush.xpose.msra.mxu0 0.0
        %794 = vmatpush.xpose.msra.mxu0 0.0
        %795 = vmatpush.xpose.msra.mxu0 0.0
        %796 = vmatpush.xpose.msra.mxu0 0.0
        %797 = vmatpush.xpose.msra.mxu0 0.0
        %798 = vmatpush.xpose.msra.mxu0 0.0
        %799 = vmatpush.xpose.msra.mxu0 %v782
        %800 = vmatmul.f32.gmra.mxu0 %v780
        %v801 = vpop.f32.mrf.mxu0
        %v802 = vadd.f32 0.0, %v801
        %803 = vdwg.mxu0
        %v804 = vsel %vm547, %v802, -inf
        %805 = vmax.xlane.f32.xlu0 %v804
        %v806 = vpop.xlane.xlu0 %805
        %v807 = vsub.f32 %v802, %v806
        %v808 = vmul.f32 %v807, 1.442695
        %v809 = vpow.pop %v808
        %v810 = vsel %vm547, %v809, 0.0
        %811 = vadd.xlane.f32.xlu0 %v810
        %v812 = vpop.xlane.xlu0 %811
        %v813 = vrcp.pop %v812
        %v814 = vmul.f32 %v812, %v813
        %v815 = vsub.f32 2.0, %v814
        %v816 = vmul.f32 %v813, %v815
        %v817 = vmul.f32 %v809, %v816
        %v818 = vadd.f32 %v775, %v817
        %819 = vrot.lane.b32.xlu0 %v438, 32
        %v820 = vpop.permute.xlu0 %819
        %821 = vrot.lane.b32.xlu0 %v518, 32
        %v822 = vpop.permute.xlu0 %821
        %v823 = vsel %vm520, %v820, 0
        %v825 = vsel %vm520, %v822, 0
        %827 = vmatpush.xpose.msra.mxu0 0.0
        %828 = vmatpush.xpose.msra.mxu0 0.0
        %829 = vmatpush.xpose.msra.mxu0 0.0
        %830 = vmatpush.xpose.msra.mxu0 0.0
        %831 = vmatpush.xpose.msra.mxu0 0.0
        %832 = vmatpush.xpose.msra.mxu0 0.0
        %833 = vmatpush.xpose.msra.mxu0 0.0
        %834 = vmatpush.xpose.msra.mxu0 0.0
        %835 = vmatpush.xpose.msra.mxu0 0.0
        %836 = vmatpush.xpose.msra.mxu0 0.0
        %837 = vmatpush.xpose.msra.mxu0 0.0
        %838 = vmatpush.xpose.msra.mxu0 0.0
        %839 = vmatpush.xpose.msra.mxu0 0.0
        %840 = vmatpush.xpose.msra.mxu0 0.0
        %841 = vmatpush.xpose.msra.mxu0 0.0
        %842 = vmatpush.xpose.msra.mxu0 %v825
        %843 = vmatmul.f32.gmra.mxu0 %v823
        %v844 = vpop.f32.mrf.mxu0
        %v845 = vadd.f32 0.0, %v844
        %846 = vdwg.mxu0
        %v847 = vsel %vm547, %v845, -inf
        %848 = vmax.xlane.f32.xlu0 %v847
        %v849 = vpop.xlane.xlu0 %848
        %v850 = vsub.f32 %v845, %v849
        %v851 = vmul.f32 %v850, 1.442695
        %v852 = vpow.pop %v851
        %v853 = vsel %vm547, %v852, 0.0
        %854 = vadd.xlane.f32.xlu0 %v853
        %v855 = vpop.xlane.xlu0 %854
        %v856 = vrcp.pop %v855
        %v857 = vmul.f32 %v855, %v856
        %v858 = vsub.f32 2.0, %v857
        %v859 = vmul.f32 %v856, %v858
        %v860 = vmul.f32 %v852, %v859
        %v861 = vadd.f32 %v818, %v860
        %v862 = vstv %s21
        %vm863 = vcmp.lt.s32.totalorder %v862, 2
        %v864 = vsel %vm863, 1, 0
        %v865 = vcvt.s32.f32 %v864
        %v866 = vmul.f32 %v861, %v865
        %v867 = vadd.f32 %v866, 0.0
        %v868 = vmul.f32 %v867, 0.125
        %869 = vst.msk [vmem:[%s219] sm:$0xff] %vm547, %v868
        %s870 = sand.u32 %s97, 1
        %s871 = scalar_lea.sflag [#allocation4], %s870
        %s872 = sand.u32 %s97, 1
        %s873 = smul.addr %s872, 8
        %s874 = scalar_lea.vmem [#allocation8], %s873
        // Predicated region
        $region45: #{tpu_custom_call.1} parent=31 // pred_check
          %p875 = pneg %p107
        $region46: #{tpu_custom_call.1} parent=31 // pred_check_branch
          %877 = sbr.rel (%p875) target = $region48
        $region47: #{tpu_custom_call.1} parent=31 // pred_region
          %879 = vsyncadd %s871, 0
          %s880 = smul.addr %s21, 8
          %s881 = scalar_lea.hbm %s3, %s880
          %s883 = sshll.u32 %s874, 4
          %s884 = int_to_ptr.vmem [resolvable:$true] %s883
          %s885 = sshll.u32 %s881, 4
          %s886 = int_to_ptr.hbm [resolvable:$true] %s885
          %888 = dma.vmem_to_hbm [thread:$0]  %s884, 128, %s886, %s871
        $region48: #{tpu_custom_call.1} parent=31 // pred_fallthru
          _
      $region32: #{tpu_custom_call.1} parent=5 // pred_fallthru
        _
      %p889 = scmp.le.s32.totalorder 2, %s16
      // Predicated region
      $region49: #{tpu_custom_call.1} parent=5 // pred_check
        %p890 = pneg %p889
      $region50: #{tpu_custom_call.1} parent=5 // pred_check_branch
        %892 = sbr.rel (%p890) target = $region52
      $region51: #{tpu_custom_call.1} parent=5 // pred_region
        %s893 = ssub.s32 %s16, 2
        // Predicated region
        $region53: #{tpu_custom_call.1} parent=51 // pred_check
          %p894 = pneg %p113
        $region54: #{tpu_custom_call.1} parent=51 // pred_check_branch
          %896 = sbr.rel (%p894) target = $region56
        $region55: #{tpu_custom_call.1} parent=51 // pred_region
          %s897 = sand.u32 %s98, 1
          %s898 = scalar_lea.sflag [#allocation4], %s897
          %s899 = sand.u32 %s98, 1
          %s900 = smul.addr %s899, 8
          %s901 = scalar_lea.vmem [#allocation8], %s900
          %903 = dma.done %s898, 128
        $region56: #{tpu_custom_call.1} parent=51 // pred_fallthru
          _
      $region52: #{tpu_custom_call.1} parent=5 // pred_fallthru
        _
    $region6: #{tpu_custom_call.1} parent=1 // loop_footer
      %s20 = sadd.s32 1, %s16
    $region7: #{tpu_custom_call.1} parent=1 // loop_footer_branch
      %15 = sbr.rel target = $region3
    $region8: #{tpu_custom_call.1} parent=1 // loop_exit
      _
    %904 = vsyncpa [#allocation3], 1
    %s905 = scalar_lea.sflag [#allocation3], 1
    %906 = vsyncpa %s905, 1
    %907 = vsyncpa [#allocation6], 1
    %908 = vsyncpa [#allocation4], 1
    %s909 = scalar_lea.sflag [#allocation4], 1
    %910 = vsyncpa %s909, 1

</llo_original>
